<compile_context>
chip_gen: v7x
topology: tpu7x:2x2x1
jax: 0.10.0
libtpu: 0.0.40
codegen_flags: <defaults>
</compile_context>

<pallas_src>
import functools
import math

import jax
import jax.numpy as jnp
from jax.experimental import pallas as pl
from jax.experimental.pallas import tpu as pltpu


# ---------------------------------------------------------------------------
# Frozen sinusoidal table (identical to the PyTorch FixedEmbedding.__init__)
# ---------------------------------------------------------------------------
def build_fixed_table(c_in: int, d_model: int) -> jnp.ndarray:
    assert d_model % 2 == 0, "FixedEmbedding expects an even d_model"
    position = jnp.arange(c_in, dtype=jnp.float32)[:, None]                  # (c_in, 1)
    div_term = jnp.exp(jnp.arange(0, d_model, 2, dtype=jnp.float32)
                       * -(math.log(10000.0) / d_model))                     # (d_model//2,)
    ang = position * div_term                                                # (c_in, d_model//2)
    w = jnp.zeros((c_in, d_model), dtype=jnp.float32)
    w = w.at[:, 0::2].set(jnp.sin(ang))
    w = w.at[:, 1::2].set(jnp.cos(ang))
    return w


def _cdiv(a: int, b: int) -> int:
    return (a + b - 1) // b


def _round_up(a: int, b: int) -> int:
    return b * _cdiv(a, b)


def _packing(c_in: int, d_model: int, *, max_pack: int = 16,
             max_table_bytes: int = 4 << 20):
    """Return (pack, d_model_eff) so pack*d_model_eff is a multiple of 128."""
    pack = 128 // math.gcd(d_model, 128)          # smallest pack with lane-dense width
    table_bytes = pack * pack * c_in * d_model * 4
    if pack <= max_pack and table_bytes <= max_table_bytes:
        return pack, d_model
    # Fallback: no packing; pad d_model up to the next multiple of 128 instead
    # (wrapper strips the padding columns).
    return 1, _round_up(d_model, 128)


# ---------------------------------------------------------------------------
# Kernel
# ---------------------------------------------------------------------------
def _fixed_embedding_kernel(idx_ref, w_ref, out_ref, *, c_in: int):
    # idx_ref : (tm, pack) int32 tile of packed indices, values in [0, c_in)
    # w_ref   : (pack*c_in, pack*d_model_eff) f32 block-diagonal table (resident)
    # out_ref : (tm, pack*d_model_eff) output tile -> lane-dense, unmasked stores
    tm, pack = idx_ref.shape
    kdim = w_ref.shape[0]
    idx = idx_ref[...]

    # Multi-hot selector over the block-diagonal vocabulary.  Boolean OR
    # accumulation + ONE final cast keeps VALU work minimal; the per-block
    # (+ r*c_in) offset is a trace-time constant folded into the compare.
    iota = jax.lax.broadcasted_iota(jnp.int32, (tm, kdim), 1)
    hit = iota == idx[:, 0:1]
    for r in range(1, pack):                                   # pack is small & static
        hit = jnp.logical_or(hit, iota == idx[:, r:r + 1] + r * c_in)

    out_ref[...] = jnp.dot(hit.astype(jnp.float32), w_ref[...],
                           preferred_element_type=jnp.float32
                           ).astype(out_ref.dtype)


# ---------------------------------------------------------------------------
# Wrapper (forward pass: returns w[x])
# ---------------------------------------------------------------------------
def _fixed_embedding_forward(x, w_bd, *, c_in, d_model, d_model_eff, pack,
                             out_dtype, tile_bytes):
    orig_shape = x.shape
    idx = x.reshape(-1).astype(jnp.int32)
    n = idx.shape[0]
    lane_w = pack * d_model_eff                         # multiple of 128 by construction

    m = _cdiv(max(n, 1), pack)                          # packed output rows needed
    m_pad = _round_up(m, 8)                             # pad only to the sublane quantum

    # Row tile: ~tile_bytes of f32 output per grid step (amortizes per-step
    # overhead); capped at half the rows (when large enough) so the "parallel"
    # axis can use both TensorCores on v7x; multiple of 8, <= m_pad.
    tm = max(8, ((tile_bytes // (lane_w * 4)) // 8) * 8)
    tm = min(tm, max(512, _round_up(m_pad // 2, 8)))
    tm = max(8, min(tm, m_pad))
    grid = (_cdiv(m_pad, tm),)

    n_pack = m_pad * pack
    if n_pack != n:
        idx = jnp.pad(idx, (0, n_pack - n))             # tail -> index 0, sliced off below
    idx = idx.reshape(m_pad, pack)

    out = pl.pallas_call(
        functools.partial(_fixed_embedding_kernel, c_in=c_in),
        out_shape=jax.ShapeDtypeStruct((m_pad, lane_w), out_dtype),
        grid_spec=pltpu.PrefetchScalarGridSpec(
            num_scalar_prefetch=0,
            grid=grid,
            in_specs=[
                # Per-step index tile: VMEM footprint O(tm), not O(N).
                pl.BlockSpec((tm, pack), lambda i: (i, 0)),
                # Block-diagonal table stays resident in VMEM (constant map).
                pl.BlockSpec(w_bd.shape, lambda i: (0, 0)),
            ],
            out_specs=pl.BlockSpec((tm, lane_w), lambda i: (i, 0)),
        ),
        compiler_params=pltpu.CompilerParams(
            dimension_semantics=("parallel",),
        ),
    )(idx, w_bd)

    # Packed (m_pad, pack*d_model_eff) layout is byte-identical to
    # (m_pad*pack, d_model_eff); slicing (a full-output copy) happens only
    # when padding was actually needed.
    out = out.reshape(n_pack, d_model_eff)
    if n_pack != n or d_model_eff != d_model:
        out = out[:n, :d_model]
    return out.reshape(orig_shape + (d_model,))


class FixedEmbedding:
    """Pallas TPU equivalent of the PyTorch FixedEmbedding module (forward only)."""

    def __init__(self, c_in: int, d_model: int, out_dtype=jnp.float32,
                 tile_bytes: int = 1 << 20):
        self.c_in, self.d_model = c_in, d_model
        self.w = build_fixed_table(c_in, d_model)                 # (c_in, d_model) f32
        self.pack, self.d_model_eff = _packing(c_in, d_model)

        w_eff = self.w
        if self.d_model_eff != d_model:
            w_eff = jnp.pad(w_eff, ((0, 0), (0, self.d_model_eff - d_model)))
        # Block-diagonal table built ONCE (weights are frozen); the per-call
        # path never re-materializes it.
        self.w_bd = (jnp.kron(jnp.eye(self.pack, dtype=w_eff.dtype), w_eff)
                     if self.pack > 1 else w_eff)

        self._fwd = jax.jit(functools.partial(
            _fixed_embedding_forward, c_in=c_in, d_model=d_model,
            d_model_eff=self.d_model_eff, pack=self.pack,
            out_dtype=out_dtype, tile_bytes=tile_bytes))

    def __call__(self, x):
        return self._fwd(x, self.w_bd)


# ---------------------------------------------------------------------------
# Demo / self-test
# ---------------------------------------------------------------------------
if __name__ == "__main__":
    c_in, d_model = 24, 32       # e.g. hour-of-day vocabulary
    emb = FixedEmbedding(c_in, d_model)

    key = jax.random.PRNGKey(0)
    k1, k2, k3 = jax.random.split(key, 3)

    # Small (batch, seq) of int ids, matching the module's typical use.
    x = jax.random.randint(k1, (2, 8), 0, c_in, dtype=jnp.int32)
    out = jax.block_until_ready(emb(x))
    ref = jnp.take(emb.w, x.reshape(-1), axis=0).reshape(2, 8, d_model)
    assert out.shape == (2, 8, d_model) and out.dtype == jnp.float32
    assert jnp.allclose(out, ref, atol=1e-6), "mismatch (small)"

    # Padding-free case: n % (8*pack) == 0 -> no tail-slice copy.
    x2 = jax.random.randint(k2, (4, 512), 0, c_in, dtype=jnp.int32)
    out2 = jax.block_until_ready(emb(x2))
    ref2 = jnp.take(emb.w, x2.reshape(-1), axis=0).reshape(4, 512, d_model)
    assert jnp.allclose(out2, ref2, atol=1e-6), "mismatch (no-pad)"

    # Larger case exercising grid >= 2 (megacore-shardable 'parallel' axis).
    x3 = jax.random.randint(k3, (8, 1024), 0, c_in, dtype=jnp.int32)
    out3 = jax.block_until_ready(emb(x3))
    ref3 = jnp.take(emb.w, x3.reshape(-1), axis=0).reshape(8, 1024, d_model)
    assert jnp.allclose(out3, ref3, atol=1e-6), "mismatch (multi-tile)"

    print("KERNEL_OK")
</pallas_src>

<mosaic_0001>
module attributes {stable_mosaic.version = 11 : i64} {
  func.func @_fixed_embedding_kernel(%arg0: i32, %arg1: memref<8x4xi32, #tpu.memory_space<vmem>>, %arg2: memref<96x128xf32, #tpu.memory_space<vmem>>, %arg3: memref<8x128xf32, #tpu.memory_space<vmem>>) attributes {dimension_semantics = [#tpu.dimension_semantics<parallel>], iteration_bounds = array<i64: 1>, scalar_prefetch = 0 : i64, scratch_operands = 0 : i64, tpu.core_type = #tpu.core_type<tc>, window_params = [{transform_indices = @transform_0, window_bounds = array<i64: 8, 4>}, {pipeline_mode = #tpu.pipeline_mode<synchronous>, transform_indices = @transform_1, window_bounds = array<i64: 96, 128>}, {transform_indices = @transform_2, window_bounds = array<i64: 8, 128>}]} {
    %c0 = arith.constant 0 : index
    %c0_0 = arith.constant 0 : index
    %0 = vector.load %arg1[%c0, %c0_0] : memref<8x4xi32, #tpu.memory_space<vmem>>, vector<8x4xi32>
    %1 = tpu.iota {dimensions = array<i32: 1>} : vector<8x96xi32>
    %2 = vector.extract_strided_slice %0 {offsets = [0, 0], sizes = [8, 1], strides = [1, 1]} : vector<8x4xi32> to vector<8x1xi32>
    %3 = vector.broadcast %2 : vector<8x1xi32> to vector<8x96xi32>
    %4 = arith.cmpi eq, %1, %3 : vector<8x96xi32>
    %5 = vector.extract_strided_slice %0 {offsets = [0, 1], sizes = [8, 1], strides = [1, 1]} : vector<8x4xi32> to vector<8x1xi32>
    %c24_i32 = arith.constant 24 : i32
    %6 = vector.broadcast %c24_i32 : i32 to vector<8x1xi32>
    %7 = arith.addi %5, %6 : vector<8x1xi32>
    %8 = vector.broadcast %7 : vector<8x1xi32> to vector<8x96xi32>
    %9 = arith.cmpi eq, %1, %8 : vector<8x96xi32>
    %10 = arith.ori %4, %9 : vector<8x96xi1>
    %11 = vector.extract_strided_slice %0 {offsets = [0, 2], sizes = [8, 1], strides = [1, 1]} : vector<8x4xi32> to vector<8x1xi32>
    %c48_i32 = arith.constant 48 : i32
    %12 = vector.broadcast %c48_i32 : i32 to vector<8x1xi32>
    %13 = arith.addi %11, %12 : vector<8x1xi32>
    %14 = vector.broadcast %13 : vector<8x1xi32> to vector<8x96xi32>
    %15 = arith.cmpi eq, %1, %14 : vector<8x96xi32>
    %16 = arith.ori %10, %15 : vector<8x96xi1>
    %17 = vector.extract_strided_slice %0 {offsets = [0, 3], sizes = [8, 1], strides = [1, 1]} : vector<8x4xi32> to vector<8x1xi32>
    %c72_i32 = arith.constant 72 : i32
    %18 = vector.broadcast %c72_i32 : i32 to vector<8x1xi32>
    %19 = arith.addi %17, %18 : vector<8x1xi32>
    %20 = vector.broadcast %19 : vector<8x1xi32> to vector<8x96xi32>
    %21 = arith.cmpi eq, %1, %20 : vector<8x96xi32>
    %22 = arith.ori %16, %21 : vector<8x96xi1>
    %23 = arith.extui %22 : vector<8x96xi1> to vector<8x96xi32>
    %24 = arith.sitofp %23 : vector<8x96xi32> to vector<8x96xf32>
    %c0_1 = arith.constant 0 : index
    %c0_2 = arith.constant 0 : index
    %25 = vector.load %arg2[%c0_1, %c0_2] : memref<96x128xf32, #tpu.memory_space<vmem>>, vector<96x128xf32>
    %cst = arith.constant dense<0.000000e+00> : vector<8x128xf32>
    %26 = tpu.matmul %24, %25, %cst {dimension_numbers = #tpu.dot_dimension_numbers<[1], [0], [0], [1], [0, 0, 1, 1], [], []>} : vector<8x96xf32>, vector<96x128xf32>, vector<8x128xf32> -> vector<8x128xf32>
    %c0_3 = arith.constant 0 : index
    %c0_4 = arith.constant 0 : index
    %27 = vector.load %arg3[%c0_3, %c0_4] : memref<8x128xf32, #tpu.memory_space<vmem>>, vector<8x128xf32>
    tpu.vector_store %arg3[%c0_3, %c0_4], %26 {strides = array<i32>} : memref<8x128xf32, #tpu.memory_space<vmem>>, vector<8x128xf32>,
    return
  }
  func.func @transform_0(%arg0: i32) -> (i32, i32) {
    %c0_i32 = arith.constant 0 : i32
    %c0_i32_0 = arith.constant 0 : i32
    return %arg0, %c0_i32 : i32, i32
  }
  func.func @transform_1(%arg0: i32) -> (i32, i32) {
    %c0_i32 = arith.constant 0 : i32
    %c0_i32_0 = arith.constant 0 : i32
    %c0_i32_1 = arith.constant 0 : i32
    return %c0_i32, %c0_i32_0 : i32, i32
  }
  func.func @transform_2(%arg0: i32) -> (i32, i32) {
    %c0_i32 = arith.constant 0 : i32
    %c0_i32_0 = arith.constant 0 : i32
    return %arg0, %c0_i32 : i32, i32
  }
}

</mosaic_0001>

<llo_original>
// kernel: _fixed_embedding_forward.1
$region0: #{_fixed_embedding_forward.1}
  #allocation0 [shape = 'u32[]', space=smem, size = 0x4, offset = 0x4, fixed_abs, tag = 'smem constant byte address 0x4 - core index']
  #allocation1 [shape = 'u32[144,128]{1,0:T(1,128)}', space=vmem, size = 0x12000, scoped, tag = 'internal scratch']
  %s0 = inlined_call_operand.vmem [shape: s32[8,4], index: 0, kind: input, shape index: {}]
  %s1 = inlined_call_operand.hbm [shape: f32[96,128], index: 1, kind: input, shape index: {}]
  %s2 = inlined_call_operand.vmem [shape: f32[8,128], index: 2, kind: output, shape index: {}]
  %s3 = sld [smem:[#allocation0]]
  $region22: #{_fixed_embedding_forward.1} parent=0
    _
  %s5 = ssub.s32 1, %s3
  %s6 = scalar_select 0, %s5, %s3
  $region1: #{_fixed_embedding_forward.1} parent=0
    #allocation2 [shape = 'u8[49152]{0}', space=vmem, size = 0xc000, scoped, tag = 'input window, operand 1, single buffered']
    #allocation3 [shape = 's32[1]{0}', space=sflag, size = 0x4, scoped, tag = 'scoped memory for _fixed_embedding_forward.1']
    %7 = vsyncpa [#allocation3], 0
    // Predicated region
    $region2: #{_fixed_embedding_forward.1} parent=1 // pred_check
      _
    $region3: #{_fixed_embedding_forward.1} parent=1 // pred_check_branch
      %9 = sbr.rel (0) target = $region5
    $region4: #{_fixed_embedding_forward.1} parent=1 // pred_region
      _
    $region5: #{_fixed_embedding_forward.1} parent=1 // pred_fallthru
      _
    // Predicated region
    $region6: #{_fixed_embedding_forward.1} parent=1 // pred_check
      _
    $region7: #{_fixed_embedding_forward.1} parent=1 // pred_check_branch
      %11 = sbr.rel (0) target = $region9
    $region8: #{_fixed_embedding_forward.1} parent=1 // pred_region
      %s13 = ssub.s32 1536, 1536
      %14 = vsyncadd [#allocation3], %s13
      %s15 = sshll.u32 [#allocation2], 4
      %s16 = int_to_ptr.vmem [resolvable:$true] %s15
      %21 = dma.hbm_to_vmem [thread:$0]  %s1, 1536, %s16, [#allocation3], 128, 128, 8
    $region9: #{_fixed_embedding_forward.1} parent=1 // pred_fallthru
      _
    // Predicated region
    $region10: #{_fixed_embedding_forward.1} parent=1 // pred_check
      _
    $region11: #{_fixed_embedding_forward.1} parent=1 // pred_check_branch
      %23 = sbr.rel (0) target = $region13
    $region12: #{_fixed_embedding_forward.1} parent=1 // pred_region
      %24 = dma.done [#allocation3], 1536
    $region13: #{_fixed_embedding_forward.1} parent=1 // pred_fallthru
      _
    %v25 = vld [vmem:[%s0] sm:$0xff]
    %v26 = vlaneseq
    %v27 = vand.u32 %v26, 127
    %28 = vset.pattern.permute.xlu0 0
    %29 = vperm.xlu0 %28, %v25
    %v30 = vpop.permute.xlu0 %29
    %vm31 = vcmp.eq.s32.totalorder %v27, %v30
    %v32 = vadd.s32 %v25, 24
    %33 = vset.pattern.permute.xlu0 1
    %34 = vperm.xlu0 %33, %v32
    %v35 = vpop.permute.xlu0 %34
    %vm36 = vcmp.eq.s32.totalorder %v27, %v35
    %vm37 = vmor %vm31, %vm36
    %v38 = vadd.s32 %v25, 48
    %39 = vset.pattern.permute.xlu0 2
    %40 = vperm.xlu0 %39, %v38
    %v41 = vpop.permute.xlu0 %40
    %vm42 = vcmp.eq.s32.totalorder %v27, %v41
    %vm43 = vmor %vm37, %vm42
    %v44 = vadd.s32 %v25, 72
    %45 = vset.pattern.permute.xlu0 3
    %46 = vperm.xlu0 %45, %v44
    %v47 = vpop.permute.xlu0 %46
    %vm48 = vcmp.eq.s32.totalorder %v27, %v47
    %vm49 = vmor %vm43, %vm48
    %v50 = vsel %vm49, 1, 0
    %v51 = vcvt.s32.f32 %v50
    %v52 = vld [vmem:[#allocation2] sm:$0xff]
    %v53 = vld [vmem:[#allocation2 + $0x8] sm:$0xff]
    %v54 = vld [vmem:[#allocation2 + $0x10] sm:$0xff]
    %v55 = vld [vmem:[#allocation2 + $0x18] sm:$0xff]
    %v56 = vld [vmem:[#allocation2 + $0x20] sm:$0xff]
    %v57 = vld [vmem:[#allocation2 + $0x28] sm:$0xff]
    %v58 = vld [vmem:[#allocation2 + $0x30] sm:$0xff]
    %v59 = vld [vmem:[#allocation2 + $0x38] sm:$0xff]
    %v60 = vld [vmem:[#allocation2 + $0x40] sm:$0xff]
    %v61 = vld [vmem:[#allocation2 + $0x48] sm:$0xff]
    %v62 = vld [vmem:[#allocation2 + $0x50] sm:$0xff]
    %v63 = vld [vmem:[#allocation2 + $0x58] sm:$0xff]
    %vm64 = vcmask 785408
    %v66 = vsel %vm64, %v51, 0
    %68 = vmatprep.subr.mxu0 0.0
    %69 = vmatpush1.msra.mxu0 %v52
    %70 = vmatprep.subr.mxu0 0.0
    %71 = vmatpush1.msra.mxu0 %v53
    %72 = vmatprep.subr.mxu0 0.0
    %73 = vmatpush1.msra.mxu0 %v54
    %74 = vmatprep.subr.mxu0 0.0
    %75 = vmatpush1.msra.mxu0 %v55
    %76 = vmatprep.subr.mxu0 0.0
    %77 = vmatpush1.msra.mxu0 %v56
    %78 = vmatprep.subr.mxu0 0.0
    %79 = vmatpush1.msra.mxu0 %v57
    %80 = vmatprep.subr.mxu0 0.0
    %81 = vmatpush1.msra.mxu0 %v58
    %82 = vmatprep.subr.mxu0 0.0
    %83 = vmatpush1.msra.mxu0 %v59
    %84 = vmatprep.subr.mxu0 0.0
    %85 = vmatpush1.msra.mxu0 %v60
    %86 = vmatprep.subr.mxu0 0.0
    %87 = vmatpush1.msra.mxu0 %v61
    %88 = vmatprep.subr.mxu0 0.0
    %89 = vmatpush1.msra.mxu0 %v62
    %90 = vmatprep.subr.mxu0 0.0
    %91 = vmatpush1.msra.mxu0 %v63
    %92 = vmatprep.subr.mxu0 0.0
    %93 = vmatpush1.msra.mxu0 0.0
    %94 = vmatprep.subr.mxu0 0.0
    %95 = vmatpush1.msra.mxu0 0.0
    %96 = vmatprep.subr.mxu0 0.0
    %97 = vmatpush1.msra.mxu0 0.0
    %98 = vmatprep.subr.mxu0 0.0
    %99 = vmatpush1.msra.mxu0 0.0
    %100 = vmatprep.subr.mxu0 0.0
    %101 = vmatpush1.msra.mxu0 0.0
    %102 = vmatprep.subr.mxu0 0.0
    %103 = vmatpush1.msra.mxu0 0.0
    %104 = vmatprep.subr.mxu0 0.0
    %105 = vmatpush1.msra.mxu0 0.0
    %106 = vmatprep.subr.mxu0 0.0
    %107 = vmatpush1.msra.mxu0 0.0
    %108 = vmatprep.subr.mxu0 0.0
    %109 = vmatpush1.msra.mxu0 0.0
    %110 = vmatprep.subr.mxu0 0.0
    %111 = vmatpush1.msra.mxu0 0.0
    %112 = vmatprep.subr.mxu0 0.0
    %113 = vmatpush1.msra.mxu0 0.0
    %114 = vmatprep.subr.mxu0 0.0
    %115 = vmatpush1.msra.mxu0 0.0
    %116 = vmatprep.subr.mxu0 0.0
    %117 = vmatpush1.msra.mxu0 0.0
    %118 = vmatprep.subr.mxu0 0.0
    %119 = vmatpush1.msra.mxu0 0.0
    %120 = vmatprep.subr.mxu0 0.0
    %121 = vmatpush1.msra.mxu0 0.0
    %122 = vmatprep.subr.mxu0 0.0
    %123 = vmatpush1.msra.mxu0 0.0
    %124 = vmatprep.subr.mxu0 0.0
    %125 = vmatpush1.msra.mxu0 0.0
    %126 = vmatprep.subr.mxu0 0.0
    %127 = vmatpush1.msra.mxu0 0.0
    %128 = vmatprep.subr.mxu0 0.0
    %129 = vmatpush1.msra.mxu0 0.0
    %130 = vmatprep.subr.mxu0 0.0
    %131 = vmatpush1.msra.mxu0 0.0
    %132 = vmatprep.mubr.f32.mxu0 0.0
    %133 = vmatmul.mubr.f32.gmra.mrb[0].mxu0 %v66
    %v134 = vpop.f32.mrb[0].mxu0
    %v135 = vadd.f32 0.0, %v134
    %v136 = vpop.f32.mrb[0].mxu0
    %137 = vdwg.mxu0
    %138 = vst [vmem:[%s2] sm:$0xff] %v135
    // Predicated region
    $region14: #{_fixed_embedding_forward.1} parent=1 // pred_check
      _
    $region15: #{_fixed_embedding_forward.1} parent=1 // pred_check_branch
      %140 = sbr.rel (0) target = $region17
    $region16: #{_fixed_embedding_forward.1} parent=1 // pred_region
      _
    $region17: #{_fixed_embedding_forward.1} parent=1 // pred_fallthru
      _
    // Predicated region
    $region18: #{_fixed_embedding_forward.1} parent=1 // pred_check
      _
    $region19: #{_fixed_embedding_forward.1} parent=1 // pred_check_branch
      %142 = sbr.rel (0) target = $region21
    $region20: #{_fixed_embedding_forward.1} parent=1 // pred_region
      _
    $region21: #{_fixed_embedding_forward.1} parent=1 // pred_fallthru
      _
    %143 = vsyncpa [#allocation3], 1

</llo_original>
